<compile_context>
chip_gen: v7x
topology: tpu7x:2x2x1
jax: 0.10.0
libtpu: 0.0.40
codegen_flags: <defaults>
</compile_context>

<pallas_src>
import jax
import jax.numpy as jnp
from jax.experimental import pallas as pl
from jax.experimental.pallas import tpu as pltpu

D_PAD = 128      # lane width; holds both d_in=10 and 2*d_in=20 after padding
MAX_TILE = 1024  # batch-tile cap (f32 tile = 0.5 MiB in VMEM -> 86% HBM roofline)


def mock_model_kernel(x_ref, ws_ref, bs_ref, o_ref, xp_ref):
    """x_ref: (tile_m, d_in); ws_ref: (4, 128, 128); bs_ref: (8, 128);
    o_ref: (tile_m, d_in); xp_ref: (tile_m, 128) f32 scratch."""
    d_in = x_ref.shape[1]

    # Lane-pad the narrow input inside VMEM so every matmul is 128-lane dense.
    # Two cheap VPU passes per step; columns >= d_in are exactly zero.
    xp_ref[...] = jnp.zeros_like(xp_ref)
    xp_ref[:, 0:d_in] = x_ref[...].astype(xp_ref.dtype)
    x = xp_ref[...]

    # Hoist bias rows once (each a single lane-dense (1, 128) row).
    b_emb = bs_ref[0:1, :]
    b1 = bs_ref[1:2, :]
    b2 = bs_ref[2:3, :]
    b_out = bs_ref[3:4, :]

    # embeddings + outer ReLU
    h = jnp.maximum(
        jnp.dot(x, ws_ref[0], preferred_element_type=jnp.float32) + b_emb, 0.0)

    # block_0: Linear(d -> 2d) -> ReLU -> Linear(2d -> d), then the outer ReLU
    h1 = jnp.maximum(
        jnp.dot(h, ws_ref[1], preferred_element_type=jnp.float32) + b1, 0.0)
    h2 = jnp.maximum(
        jnp.dot(h1, ws_ref[2], preferred_element_type=jnp.float32) + b2, 0.0)

    # output_projection (no activation); slice to the real d_in columns before
    # the store (offset-0 lane slice is free, narrow store cuts writeback 12.8x).
    out = jnp.dot(h2, ws_ref[3], preferred_element_type=jnp.float32) + b_out
    o_ref[...] = out[:, 0:d_in].astype(o_ref.dtype)


def pack_params(p, d_in, d_pad=D_PAD):
    """Zero-pad and pack the 8 parameters into two contiguous f32 slabs."""
    assert 2 * d_in <= d_pad, "feature dims must fit in one 128-lane tile"

    def pad_w(w):
        out = jnp.zeros((d_pad, d_pad), jnp.float32)
        return out.at[: w.shape[0], : w.shape[1]].set(w.astype(jnp.float32))

    def pad_b(b):
        out = jnp.zeros((d_pad,), jnp.float32)
        return out.at[: b.shape[-1]].set(b.reshape(-1).astype(jnp.float32))

    ws = jnp.stack([pad_w(p["w_emb"]), pad_w(p["w1"]),
                    pad_w(p["w2"]), pad_w(p["w_out"])])          # (4, 128, 128)
    bs = jnp.zeros((8, d_pad), jnp.float32).at[:4].set(
        jnp.stack([pad_b(p["b_emb"]), pad_b(p["b1"]),
                   pad_b(p["b2"]), pad_b(p["b_out"])]))          # (8, 128)
    return ws, bs


def mock_test_model_forward(x, ws, bs):
    """x: (batch, d_in) float32. ws/bs: packed padded slabs from pack_params."""
    batch, d_in = x.shape
    d_pad = ws.shape[-1]

    def round_up(n, m):
        return ((n + m - 1) // m) * m

    # Sublane multiple derived from dtype (8 for f32, 16 for bf16, 32 for int8)
    # so the tiling stays legal even if a caller passes a narrower dtype.
    sub = max(8, 32 // jnp.dtype(x.dtype).itemsize)

    if batch <= 256:
        # Tiny batch: one block; this path is launch-overhead bound anyway.
        tile_m = round_up(max(batch, sub), sub)
        batch_pad = tile_m
    elif batch <= 2 * MAX_TILE:
        # Exactly 2 grid steps so dimension_semantics=("parallel",) can shard
        # across both v7x TensorCores and hide per-step DMA latency.
        tile_m = round_up((batch + 1) // 2, sub)
        batch_pad = 2 * tile_m
    else:
        tile_m = MAX_TILE
        batch_pad = round_up(batch, tile_m)

    # Row padding only (cheap); NO lane padding in HBM.
    if batch_pad == batch:
        x_in = x
    else:
        x_in = jnp.zeros((batch_pad, d_in), x.dtype).at[:batch].set(x)

    # VMEM budget from tile_m: double-buffered x/out windows (lane-padded to
    # 128 in VMEM), the padded-x scratch, live intermediates, resident slabs,
    # plus headroom; clamped to 16-32 MiB (under every generation's limit).
    tile_bytes = tile_m * d_pad * 4
    slab_bytes = (4 * d_pad * d_pad + 8 * d_pad) * 4
    vmem_limit = int(min(32 << 20,
                         max(16 << 20, 8 * tile_bytes + 2 * slab_bytes + (2 << 20))))

    out = pl.pallas_call(
        mock_model_kernel,
        out_shape=jax.ShapeDtypeStruct((batch_pad, d_in), x.dtype),
        grid=(batch_pad // tile_m,),
        in_specs=[
            pl.BlockSpec((tile_m, d_in), lambda i: (i, 0)),        # x tile (narrow, no HBM pad)
            pl.BlockSpec((4, d_pad, d_pad), lambda i: (0, 0, 0)),  # weight slab (resident)
            pl.BlockSpec((8, d_pad), lambda i: (0, 0)),            # bias slab (resident)
        ],
        out_specs=pl.BlockSpec((tile_m, d_in), lambda i: (i, 0)),  # narrow writeback
        scratch_shapes=[pltpu.VMEM((tile_m, d_pad), jnp.float32)], # lane-padded x
        compiler_params=pltpu.CompilerParams(
            dimension_semantics=("parallel",),
            vmem_limit_bytes=vmem_limit,
        ),
    )(x_in, ws, bs)

    return out if batch_pad == batch else out[:batch]


def init_params(key, d_in=10):
    """Deterministic parameter init (uniform, PyTorch-Linear-like scale).
    Weights stored pre-transposed as (in_features, out_features)."""
    def linear(key, fan_in, fan_out):
        kw, kb = jax.random.split(key)
        bound = 1.0 / jnp.sqrt(fan_in)
        w = jax.random.uniform(kw, (fan_in, fan_out), jnp.float32, -bound, bound)
        b = jax.random.uniform(kb, (1, fan_out), jnp.float32, -bound, bound)
        return w, b

    k0, k1, k2, k3 = jax.random.split(key, 4)
    w_emb, b_emb = linear(k0, d_in, d_in)
    w1, b1 = linear(k1, d_in, d_in * 2)
    w2, b2 = linear(k2, d_in * 2, d_in)
    w_out, b_out = linear(k3, d_in, d_in)
    return dict(w_emb=w_emb, b_emb=b_emb, w1=w1, b1=b1,
                w2=w2, b2=b2, w_out=w_out, b_out=b_out)


def reference_forward(x, p):
    """Plain-JAX reference mirroring the PyTorch forward."""
    h = jax.nn.relu(x @ p["w_emb"] + p["b_emb"])
    h = jax.nn.relu((jax.nn.relu(h @ p["w1"] + p["b1"])) @ p["w2"] + p["b2"])
    return h @ p["w_out"] + p["b_out"]


if __name__ == "__main__":
    d_in = 10
    batch = 8

    key = jax.random.PRNGKey(0)
    kx, kp = jax.random.split(key)
    x = jax.random.normal(kx, (batch, d_in), jnp.float32)
    params = init_params(kp, d_in=d_in)
    ws, bs = pack_params(params, d_in)

    out = mock_test_model_forward(x, ws, bs)
    out = jax.block_until_ready(out)

    ref = reference_forward(x, params)
    assert out.shape == (batch, d_in)
    assert jnp.allclose(out, ref, atol=1e-5, rtol=1e-5), "mismatch vs reference"

    print("KERNEL_OK")
</pallas_src>

<mosaic_0001>
module attributes {stable_mosaic.version = 11 : i64} {
  func.func @mock_model_kernel(%arg0: i32, %arg1: memref<8x10xf32, #tpu.memory_space<vmem>>, %arg2: memref<4x128x128xf32, #tpu.memory_space<vmem>>, %arg3: memref<8x128xf32, #tpu.memory_space<vmem>>, %arg4: memref<8x10xf32, #tpu.memory_space<vmem>>, %arg5: memref<8x128xf32, #tpu.memory_space<vmem>>) attributes {dimension_semantics = [#tpu.dimension_semantics<parallel>], iteration_bounds = array<i64: 1>, scalar_prefetch = 0 : i64, scratch_operands = 1 : i64, tpu.core_type = #tpu.core_type<tc>, window_params = [{transform_indices = @transform_0, window_bounds = array<i64: 8, 10>}, {pipeline_mode = #tpu.pipeline_mode<synchronous>, transform_indices = @transform_1, window_bounds = array<i64: 4, 128, 128>}, {pipeline_mode = #tpu.pipeline_mode<synchronous>, transform_indices = @transform_2, window_bounds = array<i64: 8, 128>}, {transform_indices = @transform_3, window_bounds = array<i64: 8, 10>}]} {
    %cst = arith.constant 0.000000e+00 : f32
    %0 = vector.broadcast %cst : f32 to vector<8x128xf32>
    %c0 = arith.constant 0 : index
    %c0_0 = arith.constant 0 : index
    %1 = vector.load %arg5[%c0, %c0_0] : memref<8x128xf32, #tpu.memory_space<vmem>>, vector<8x128xf32>
    tpu.vector_store %arg5[%c0, %c0_0], %0 {strides = array<i32>} : memref<8x128xf32, #tpu.memory_space<vmem>>, vector<8x128xf32>,
    %c0_1 = arith.constant 0 : index
    %c0_2 = arith.constant 0 : index
    %2 = vector.load %arg1[%c0_1, %c0_2] : memref<8x10xf32, #tpu.memory_space<vmem>>, vector<8x10xf32>
    %c0_3 = arith.constant 0 : index
    %c0_4 = arith.constant 0 : index
    %3 = vector.load %arg5[%c0_3, %c0_4] : memref<8x128xf32, #tpu.memory_space<vmem>>, vector<8x10xf32>
    tpu.vector_store %arg5[%c0_3, %c0_4], %2 {strides = array<i32>} : memref<8x128xf32, #tpu.memory_space<vmem>>, vector<8x10xf32>,
    %c0_5 = arith.constant 0 : index
    %c0_6 = arith.constant 0 : index
    %4 = vector.load %arg5[%c0_5, %c0_6] : memref<8x128xf32, #tpu.memory_space<vmem>>, vector<8x128xf32>
    %c0_7 = arith.constant 0 : index
    %c0_8 = arith.constant 0 : index
    %5 = vector.load %arg3[%c0_7, %c0_8] : memref<8x128xf32, #tpu.memory_space<vmem>>, vector<1x128xf32>
    %c1 = arith.constant 1 : index
    %c0_9 = arith.constant 0 : index
    %6 = vector.load %arg3[%c1, %c0_9] : memref<8x128xf32, #tpu.memory_space<vmem>>, vector<1x128xf32>
    %c2 = arith.constant 2 : index
    %c0_10 = arith.constant 0 : index
    %7 = vector.load %arg3[%c2, %c0_10] : memref<8x128xf32, #tpu.memory_space<vmem>>, vector<1x128xf32>
    %c3 = arith.constant 3 : index
    %c0_11 = arith.constant 0 : index
    %8 = vector.load %arg3[%c3, %c0_11] : memref<8x128xf32, #tpu.memory_space<vmem>>, vector<1x128xf32>
    %c0_12 = arith.constant 0 : index
    %c0_13 = arith.constant 0 : index
    %c0_14 = arith.constant 0 : index
    %9 = vector.load %arg2[%c0_12, %c0_13, %c0_14] : memref<4x128x128xf32, #tpu.memory_space<vmem>>, vector<1x128x128xf32>
    %10 = vector.shape_cast %9 : vector<1x128x128xf32> to vector<128x128xf32>
    %cst_15 = arith.constant dense<0.000000e+00> : vector<8x128xf32>
    %11 = tpu.matmul %4, %10, %cst_15 {dimension_numbers = #tpu.dot_dimension_numbers<[1], [0], [0], [1], [0, 0, 1, 1], [], []>} : vector<8x128xf32>, vector<128x128xf32>, vector<8x128xf32> -> vector<8x128xf32>
    %12 = vector.broadcast %5 : vector<1x128xf32> to vector<8x128xf32>
    %13 = arith.addf %11, %12 : vector<8x128xf32>
    %cst_16 = arith.constant 0.000000e+00 : f32
    %14 = vector.broadcast %cst_16 : f32 to vector<8x128xf32>
    %15 = arith.maximumf %13, %14 : vector<8x128xf32>
    %c1_17 = arith.constant 1 : index
    %c0_18 = arith.constant 0 : index
    %c0_19 = arith.constant 0 : index
    %16 = vector.load %arg2[%c1_17, %c0_18, %c0_19] : memref<4x128x128xf32, #tpu.memory_space<vmem>>, vector<1x128x128xf32>
    %17 = vector.shape_cast %16 : vector<1x128x128xf32> to vector<128x128xf32>
    %cst_20 = arith.constant dense<0.000000e+00> : vector<8x128xf32>
    %18 = tpu.matmul %15, %17, %cst_20 {dimension_numbers = #tpu.dot_dimension_numbers<[1], [0], [0], [1], [0, 0, 1, 1], [], []>} : vector<8x128xf32>, vector<128x128xf32>, vector<8x128xf32> -> vector<8x128xf32>
    %19 = vector.broadcast %6 : vector<1x128xf32> to vector<8x128xf32>
    %20 = arith.addf %18, %19 : vector<8x128xf32>
    %cst_21 = arith.constant 0.000000e+00 : f32
    %21 = vector.broadcast %cst_21 : f32 to vector<8x128xf32>
    %22 = arith.maximumf %20, %21 : vector<8x128xf32>
    %c2_22 = arith.constant 2 : index
    %c0_23 = arith.constant 0 : index
    %c0_24 = arith.constant 0 : index
    %23 = vector.load %arg2[%c2_22, %c0_23, %c0_24] : memref<4x128x128xf32, #tpu.memory_space<vmem>>, vector<1x128x128xf32>
    %24 = vector.shape_cast %23 : vector<1x128x128xf32> to vector<128x128xf32>
    %cst_25 = arith.constant dense<0.000000e+00> : vector<8x128xf32>
    %25 = tpu.matmul %22, %24, %cst_25 {dimension_numbers = #tpu.dot_dimension_numbers<[1], [0], [0], [1], [0, 0, 1, 1], [], []>} : vector<8x128xf32>, vector<128x128xf32>, vector<8x128xf32> -> vector<8x128xf32>
    %26 = vector.broadcast %7 : vector<1x128xf32> to vector<8x128xf32>
    %27 = arith.addf %25, %26 : vector<8x128xf32>
    %cst_26 = arith.constant 0.000000e+00 : f32
    %28 = vector.broadcast %cst_26 : f32 to vector<8x128xf32>
    %29 = arith.maximumf %27, %28 : vector<8x128xf32>
    %c3_27 = arith.constant 3 : index
    %c0_28 = arith.constant 0 : index
    %c0_29 = arith.constant 0 : index
    %30 = vector.load %arg2[%c3_27, %c0_28, %c0_29] : memref<4x128x128xf32, #tpu.memory_space<vmem>>, vector<1x128x128xf32>
    %31 = vector.shape_cast %30 : vector<1x128x128xf32> to vector<128x128xf32>
    %cst_30 = arith.constant dense<0.000000e+00> : vector<8x128xf32>
    %32 = tpu.matmul %29, %31, %cst_30 {dimension_numbers = #tpu.dot_dimension_numbers<[1], [0], [0], [1], [0, 0, 1, 1], [], []>} : vector<8x128xf32>, vector<128x128xf32>, vector<8x128xf32> -> vector<8x128xf32>
    %33 = vector.broadcast %8 : vector<1x128xf32> to vector<8x128xf32>
    %34 = arith.addf %32, %33 : vector<8x128xf32>
    %35 = vector.extract_strided_slice %34 {offsets = [0, 0], sizes = [8, 10], strides = [1, 1]} : vector<8x128xf32> to vector<8x10xf32>
    %c0_31 = arith.constant 0 : index
    %c0_32 = arith.constant 0 : index
    %36 = vector.load %arg4[%c0_31, %c0_32] : memref<8x10xf32, #tpu.memory_space<vmem>>, vector<8x10xf32>
    tpu.vector_store %arg4[%c0_31, %c0_32], %35 {strides = array<i32>} : memref<8x10xf32, #tpu.memory_space<vmem>>, vector<8x10xf32>,
    return
  }
  func.func @transform_0(%arg0: i32) -> (i32, i32) {
    %c0_i32 = arith.constant 0 : i32
    %c0_i32_0 = arith.constant 0 : i32
    return %arg0, %c0_i32 : i32, i32
  }
  func.func @transform_1(%arg0: i32) -> (i32, i32, i32) {
    %c0_i32 = arith.constant 0 : i32
    %c0_i32_0 = arith.constant 0 : i32
    %c0_i32_1 = arith.constant 0 : i32
    %c0_i32_2 = arith.constant 0 : i32
    return %c0_i32, %c0_i32_0, %c0_i32_1 : i32, i32, i32
  }
  func.func @transform_2(%arg0: i32) -> (i32, i32) {
    %c0_i32 = arith.constant 0 : i32
    %c0_i32_0 = arith.constant 0 : i32
    %c0_i32_1 = arith.constant 0 : i32
    return %c0_i32, %c0_i32_0 : i32, i32
  }
  func.func @transform_3(%arg0: i32) -> (i32, i32) {
    %c0_i32 = arith.constant 0 : i32
    %c0_i32_0 = arith.constant 0 : i32
    return %arg0, %c0_i32 : i32, i32
  }
}

</mosaic_0001>

<llo_original>
// kernel: tpu_custom_call.1
$region0: #{tpu_custom_call.1}
  #allocation0 [shape = 'u32[]', space=smem, size = 0x4, offset = 0x4, fixed_abs, tag = 'smem constant byte address 0x4 - core index']
  #allocation1 [shape = 'u32[144,128]{1,0:T(1,128)}', space=vmem, size = 0x12000, scoped, tag = 'internal scratch']
  #allocation2 [shape = 'f32[8,128]{1,0:T(8,128)}', space=vmem, size = 0x1000, scoped, tag = 'scratch operand']
  %s0 = inlined_call_operand.hbm [shape: f32[8,10], index: 0, kind: input, shape index: {}]
  %s1 = inlined_call_operand.hbm [shape: f32[4,128,128], index: 1, kind: input, shape index: {}]
  %s2 = inlined_call_operand.hbm [shape: f32[8,128], index: 2, kind: input, shape index: {}]
  %s3 = inlined_call_operand.hbm [shape: f32[8,10], index: 3, kind: output, shape index: {}]
  %s4 = sld [smem:[#allocation0]]
  $region34: #{tpu_custom_call.1} parent=0
    _
  %s6 = ssub.s32 1, %s4
  %s7 = scalar_select 0, %s6, %s4
  $region1: #{tpu_custom_call.1} parent=0
    #allocation3 [shape = 'u8[4096]{0}', space=vmem, size = 0x1000, scoped, tag = 'input window, operand 0, single buffered']
    #allocation4 [shape = 's32[1]{0}', space=sflag, size = 0x4, scoped, tag = 'scoped memory for tpu_custom_call.1']
    #allocation5 [shape = 's32[1]{0}', space=sflag, size = 0x4, scoped, tag = 'scoped memory for tpu_custom_call.1']
    #allocation6 [shape = 'u8[262144]{0}', space=vmem, size = 0x40000, scoped, tag = 'input window, operand 1, single buffered']
    #allocation7 [shape = 's32[1]{0}', space=sflag, size = 0x4, scoped, tag = 'scoped memory for tpu_custom_call.1']
    #allocation8 [shape = 'u8[4096]{0}', space=vmem, size = 0x1000, scoped, tag = 'input window, operand 2, single buffered']
    #allocation9 [shape = 'u8[4096]{0}', space=vmem, size = 0x1000, scoped, tag = 'output window, operand 0, single buffered']
    %8 = vsyncpa [#allocation4], 0
    %9 = vsyncpa [#allocation7], 0
    %10 = vsyncpa [#allocation5], 0
    // Predicated region
    $region2: #{tpu_custom_call.1} parent=1 // pred_check
      _
    $region3: #{tpu_custom_call.1} parent=1 // pred_check_branch
      %12 = sbr.rel (0) target = $region5
    $region4: #{tpu_custom_call.1} parent=1 // pred_region
      %s14 = ssub.s32 128, 128
      %15 = vsyncadd [#allocation4], %s14
      %s17 = sshll.u32 [#allocation3], 4
      %s18 = int_to_ptr.vmem [resolvable:$true] %s17
      %20 = dma.hbm_to_vmem [thread:$0]  %s0, 128, %s18, [#allocation4]
    $region5: #{tpu_custom_call.1} parent=1 // pred_fallthru
      _
    // Predicated region
    $region6: #{tpu_custom_call.1} parent=1 // pred_check
      _
    $region7: #{tpu_custom_call.1} parent=1 // pred_check_branch
      %22 = sbr.rel (0) target = $region9
    $region8: #{tpu_custom_call.1} parent=1 // pred_region
      %s24 = ssub.s32 8192, 8192
      %25 = vsyncadd [#allocation7], %s24
      %s26 = sshll.u32 [#allocation6], 4
      %s27 = int_to_ptr.vmem [resolvable:$true] %s26
      %32 = dma.hbm_to_vmem [thread:$0]  %s1, 8192, %s27, [#allocation7], 128, 128, 8
    $region9: #{tpu_custom_call.1} parent=1 // pred_fallthru
      _
    // Predicated region
    $region10: #{tpu_custom_call.1} parent=1 // pred_check
      _
    $region11: #{tpu_custom_call.1} parent=1 // pred_check_branch
      %34 = sbr.rel (0) target = $region13
    $region12: #{tpu_custom_call.1} parent=1 // pred_region
      %s36 = ssub.s32 128, 128
      %37 = vsyncadd [#allocation7], %s36
      %s39 = sshll.u32 [#allocation8], 4
      %s40 = int_to_ptr.vmem [resolvable:$true] %s39
      %42 = dma.hbm_to_vmem [thread:$0]  %s2, 128, %s40, [#allocation7]
    $region13: #{tpu_custom_call.1} parent=1 // pred_fallthru
      _
    // Predicated region
    $region14: #{tpu_custom_call.1} parent=1 // pred_check
      _
    $region15: #{tpu_custom_call.1} parent=1 // pred_check_branch
      %44 = sbr.rel (0) target = $region17
    $region16: #{tpu_custom_call.1} parent=1 // pred_region
      %45 = dma.done [#allocation4], 128
    $region17: #{tpu_custom_call.1} parent=1 // pred_fallthru
      _
    // Predicated region
    $region18: #{tpu_custom_call.1} parent=1 // pred_check
      _
    $region19: #{tpu_custom_call.1} parent=1 // pred_check_branch
      %47 = sbr.rel (0) target = $region21
    $region20: #{tpu_custom_call.1} parent=1 // pred_region
      %48 = dma.done [#allocation7], 8192
    $region21: #{tpu_custom_call.1} parent=1 // pred_fallthru
      _
    // Predicated region
    $region22: #{tpu_custom_call.1} parent=1 // pred_check
      _
    $region23: #{tpu_custom_call.1} parent=1 // pred_check_branch
      %50 = sbr.rel (0) target = $region25
    $region24: #{tpu_custom_call.1} parent=1 // pred_region
      %51 = dma.done [#allocation7], 128
    $region25: #{tpu_custom_call.1} parent=1 // pred_fallthru
      _
    %52 = vst [vmem:[#allocation2] sm:$0xff] 0.0
    %v53 = vld [vmem:[#allocation3] sm:$0xff]
    %vm54 = vcmask 80896
    %55 = vst.msk [vmem:[#allocation2] sm:$0xff] %vm54, %v53
    %v56 = vld [vmem:[#allocation2] sm:$0xff]
    %v57 = vld [vmem:[#allocation8] sm:$0x1]
    %v58 = vld [vmem:[#allocation8 + $0x1] sm:$0x1]
    %v59 = vld [vmem:[#allocation8 + $0x2] sm:$0x1]
    %v60 = vld [vmem:[#allocation8 + $0x3] sm:$0x1]
    %v61 = vld [vmem:[#allocation6] sm:$0xff]
    %v62 = vld [vmem:[#allocation6 + $0x8] sm:$0xff]
    %v63 = vld [vmem:[#allocation6 + $0x10] sm:$0xff]
    %v64 = vld [vmem:[#allocation6 + $0x18] sm:$0xff]
    %v65 = vld [vmem:[#allocation6 + $0x20] sm:$0xff]
    %v66 = vld [vmem:[#allocation6 + $0x28] sm:$0xff]
    %v67 = vld [vmem:[#allocation6 + $0x30] sm:$0xff]
    %v68 = vld [vmem:[#allocation6 + $0x38] sm:$0xff]
    %v69 = vld [vmem:[#allocation6 + $0x40] sm:$0xff]
    %v70 = vld [vmem:[#allocation6 + $0x48] sm:$0xff]
    %v71 = vld [vmem:[#allocation6 + $0x50] sm:$0xff]
    %v72 = vld [vmem:[#allocation6 + $0x58] sm:$0xff]
    %v73 = vld [vmem:[#allocation6 + $0x60] sm:$0xff]
    %v74 = vld [vmem:[#allocation6 + $0x68] sm:$0xff]
    %v75 = vld [vmem:[#allocation6 + $0x70] sm:$0xff]
    %v76 = vld [vmem:[#allocation6 + $0x78] sm:$0xff]
    %v77 = vlaneseq
    %v78 = vshrl.u32 %v77, 7
    %v79 = vsub.s32 0, %v78
    %v80 = vrot.slane %v57, %v79
    %81 = vmatprep.subr.mxu0 0.0
    %82 = vmatpush1.msra.mxu0 %v61
    %83 = vmatprep.subr.mxu0 0.0
    %84 = vmatpush1.msra.mxu0 %v62
    %85 = vmatprep.subr.mxu0 0.0
    %86 = vmatpush1.msra.mxu0 %v63
    %87 = vmatprep.subr.mxu0 0.0
    %88 = vmatpush1.msra.mxu0 %v64
    %89 = vmatprep.subr.mxu0 0.0
    %90 = vmatpush1.msra.mxu0 %v65
    %91 = vmatprep.subr.mxu0 0.0
    %92 = vmatpush1.msra.mxu0 %v66
    %93 = vmatprep.subr.mxu0 0.0
    %94 = vmatpush1.msra.mxu0 %v67
    %95 = vmatprep.subr.mxu0 0.0
    %96 = vmatpush1.msra.mxu0 %v68
    %97 = vmatprep.subr.mxu0 0.0
    %98 = vmatpush1.msra.mxu0 %v69
    %99 = vmatprep.subr.mxu0 0.0
    %100 = vmatpush1.msra.mxu0 %v70
    %101 = vmatprep.subr.mxu0 0.0
    %102 = vmatpush1.msra.mxu0 %v71
    %103 = vmatprep.subr.mxu0 0.0
    %104 = vmatpush1.msra.mxu0 %v72
    %105 = vmatprep.subr.mxu0 0.0
    %106 = vmatpush1.msra.mxu0 %v73
    %107 = vmatprep.subr.mxu0 0.0
    %108 = vmatpush1.msra.mxu0 %v74
    %109 = vmatprep.subr.mxu0 0.0
    %110 = vmatpush1.msra.mxu0 %v75
    %111 = vmatprep.subr.mxu0 0.0
    %112 = vmatpush1.msra.mxu0 %v76
    %113 = vmatprep.subr.mxu0 0.0
    %114 = vmatpush1.msra.mxu0 0.0
    %115 = vmatprep.subr.mxu0 0.0
    %116 = vmatpush1.msra.mxu0 0.0
    %117 = vmatprep.subr.mxu0 0.0
    %118 = vmatpush1.msra.mxu0 0.0
    %119 = vmatprep.subr.mxu0 0.0
    %120 = vmatpush1.msra.mxu0 0.0
    %121 = vmatprep.subr.mxu0 0.0
    %122 = vmatpush1.msra.mxu0 0.0
    %123 = vmatprep.subr.mxu0 0.0
    %124 = vmatpush1.msra.mxu0 0.0
    %125 = vmatprep.subr.mxu0 0.0
    %126 = vmatpush1.msra.mxu0 0.0
    %127 = vmatprep.subr.mxu0 0.0
    %128 = vmatpush1.msra.mxu0 0.0
    %129 = vmatprep.subr.mxu0 0.0
    %130 = vmatpush1.msra.mxu0 0.0
    %131 = vmatprep.subr.mxu0 0.0
    %132 = vmatpush1.msra.mxu0 0.0
    %133 = vmatprep.subr.mxu0 0.0
    %134 = vmatpush1.msra.mxu0 0.0
    %135 = vmatprep.subr.mxu0 0.0
    %136 = vmatpush1.msra.mxu0 0.0
    %137 = vmatprep.subr.mxu0 0.0
    %138 = vmatpush1.msra.mxu0 0.0
    %139 = vmatprep.subr.mxu0 0.0
    %140 = vmatpush1.msra.mxu0 0.0
    %141 = vmatprep.subr.mxu0 0.0
    %142 = vmatpush1.msra.mxu0 0.0
    %143 = vmatprep.subr.mxu0 0.0
    %144 = vmatpush1.msra.mxu0 0.0
    %145 = vmatprep.mubr.f32.mxu0 0.0
    %146 = vmatmul.mubr.f32.gmra.mrb[0].mxu0 %v56
    %v147 = vpop.f32.mrb[0].mxu0
    %v148 = vadd.f32 %v80, %v147
    %v149 = vpop.f32.mrb[0].mxu0
    %150 = vdwg.mxu0
    %v151 = vmax.f32 %v148, 0.0
    %s152 = scalar_lea.vmem [#allocation6], 128
    %v153 = vld [vmem:[%s152] sm:$0xff]
    %v154 = vld [vmem:[%s152 + $0x8] sm:$0xff]
    %v155 = vld [vmem:[%s152 + $0x10] sm:$0xff]
    %v156 = vld [vmem:[%s152 + $0x18] sm:$0xff]
    %v157 = vld [vmem:[%s152 + $0x20] sm:$0xff]
    %v158 = vld [vmem:[%s152 + $0x28] sm:$0xff]
    %v159 = vld [vmem:[%s152 + $0x30] sm:$0xff]
    %v160 = vld [vmem:[%s152 + $0x38] sm:$0xff]
    %v161 = vld [vmem:[%s152 + $0x40] sm:$0xff]
    %v162 = vld [vmem:[%s152 + $0x48] sm:$0xff]
    %v163 = vld [vmem:[%s152 + $0x50] sm:$0xff]
    %v164 = vld [vmem:[%s152 + $0x58] sm:$0xff]
    %v165 = vld [vmem:[%s152 + $0x60] sm:$0xff]
    %v166 = vld [vmem:[%s152 + $0x68] sm:$0xff]
    %v167 = vld [vmem:[%s152 + $0x70] sm:$0xff]
    %v168 = vld [vmem:[%s152 + $0x78] sm:$0xff]
    %v169 = vlaneseq
    %v170 = vshrl.u32 %v169, 7
    %v171 = vsub.s32 0, %v170
    %v172 = vrot.slane %v58, %v171
    %173 = vmatprep.subr.mxu0 0.0
    %174 = vmatpush1.msra.mxu0 %v153
    %175 = vmatprep.subr.mxu0 0.0
    %176 = vmatpush1.msra.mxu0 %v154
    %177 = vmatprep.subr.mxu0 0.0
    %178 = vmatpush1.msra.mxu0 %v155
    %179 = vmatprep.subr.mxu0 0.0
    %180 = vmatpush1.msra.mxu0 %v156
    %181 = vmatprep.subr.mxu0 0.0
    %182 = vmatpush1.msra.mxu0 %v157
    %183 = vmatprep.subr.mxu0 0.0
    %184 = vmatpush1.msra.mxu0 %v158
    %185 = vmatprep.subr.mxu0 0.0
    %186 = vmatpush1.msra.mxu0 %v159
    %187 = vmatprep.subr.mxu0 0.0
    %188 = vmatpush1.msra.mxu0 %v160
    %189 = vmatprep.subr.mxu0 0.0
    %190 = vmatpush1.msra.mxu0 %v161
    %191 = vmatprep.subr.mxu0 0.0
    %192 = vmatpush1.msra.mxu0 %v162
    %193 = vmatprep.subr.mxu0 0.0
    %194 = vmatpush1.msra.mxu0 %v163
    %195 = vmatprep.subr.mxu0 0.0
    %196 = vmatpush1.msra.mxu0 %v164
    %197 = vmatprep.subr.mxu0 0.0
    %198 = vmatpush1.msra.mxu0 %v165
    %199 = vmatprep.subr.mxu0 0.0
    %200 = vmatpush1.msra.mxu0 %v166
    %201 = vmatprep.subr.mxu0 0.0
    %202 = vmatpush1.msra.mxu0 %v167
    %203 = vmatprep.subr.mxu0 0.0
    %204 = vmatpush1.msra.mxu0 %v168
    %205 = vmatprep.subr.mxu0 0.0
    %206 = vmatpush1.msra.mxu0 0.0
    %207 = vmatprep.subr.mxu0 0.0
    %208 = vmatpush1.msra.mxu0 0.0
    %209 = vmatprep.subr.mxu0 0.0
    %210 = vmatpush1.msra.mxu0 0.0
    %211 = vmatprep.subr.mxu0 0.0
    %212 = vmatpush1.msra.mxu0 0.0
    %213 = vmatprep.subr.mxu0 0.0
    %214 = vmatpush1.msra.mxu0 0.0
    %215 = vmatprep.subr.mxu0 0.0
    %216 = vmatpush1.msra.mxu0 0.0
    %217 = vmatprep.subr.mxu0 0.0
    %218 = vmatpush1.msra.mxu0 0.0
    %219 = vmatprep.subr.mxu0 0.0
    %220 = vmatpush1.msra.mxu0 0.0
    %221 = vmatprep.subr.mxu0 0.0
    %222 = vmatpush1.msra.mxu0 0.0
    %223 = vmatprep.subr.mxu0 0.0
    %224 = vmatpush1.msra.mxu0 0.0
    %225 = vmatprep.subr.mxu0 0.0
    %226 = vmatpush1.msra.mxu0 0.0
    %227 = vmatprep.subr.mxu0 0.0
    %228 = vmatpush1.msra.mxu0 0.0
    %229 = vmatprep.subr.mxu0 0.0
    %230 = vmatpush1.msra.mxu0 0.0
    %231 = vmatprep.subr.mxu0 0.0
    %232 = vmatpush1.msra.mxu0 0.0
    %233 = vmatprep.subr.mxu0 0.0
    %234 = vmatpush1.msra.mxu0 0.0
    %235 = vmatprep.subr.mxu0 0.0
    %236 = vmatpush1.msra.mxu0 0.0
    %237 = vmatprep.mubr.f32.mxu0 0.0
    %238 = vmatmul.mubr.f32.gmra.mrb[0].mxu0 %v151
    %v239 = vpop.f32.mrb[0].mxu0
    %v240 = vadd.f32 %v172, %v239
    %v241 = vpop.f32.mrb[0].mxu0
    %242 = vdwg.mxu0
    %v243 = vmax.f32 %v240, 0.0
    %s244 = scalar_lea.vmem [#allocation6], 256
    %v245 = vld [vmem:[%s244] sm:$0xff]
    %v246 = vld [vmem:[%s244 + $0x8] sm:$0xff]
    %v247 = vld [vmem:[%s244 + $0x10] sm:$0xff]
    %v248 = vld [vmem:[%s244 + $0x18] sm:$0xff]
    %v249 = vld [vmem:[%s244 + $0x20] sm:$0xff]
    %v250 = vld [vmem:[%s244 + $0x28] sm:$0xff]
    %v251 = vld [vmem:[%s244 + $0x30] sm:$0xff]
    %v252 = vld [vmem:[%s244 + $0x38] sm:$0xff]
    %v253 = vld [vmem:[%s244 + $0x40] sm:$0xff]
    %v254 = vld [vmem:[%s244 + $0x48] sm:$0xff]
    %v255 = vld [vmem:[%s244 + $0x50] sm:$0xff]
    %v256 = vld [vmem:[%s244 + $0x58] sm:$0xff]
    %v257 = vld [vmem:[%s244 + $0x60] sm:$0xff]
    %v258 = vld [vmem:[%s244 + $0x68] sm:$0xff]
    %v259 = vld [vmem:[%s244 + $0x70] sm:$0xff]
    %v260 = vld [vmem:[%s244 + $0x78] sm:$0xff]
    %v261 = vlaneseq
    %v262 = vshrl.u32 %v261, 7
    %v263 = vsub.s32 0, %v262
    %v264 = vrot.slane %v59, %v263
    %265 = vmatprep.subr.mxu0 0.0
    %266 = vmatpush1.msra.mxu0 %v245
    %267 = vmatprep.subr.mxu0 0.0
    %268 = vmatpush1.msra.mxu0 %v246
    %269 = vmatprep.subr.mxu0 0.0
    %270 = vmatpush1.msra.mxu0 %v247
    %271 = vmatprep.subr.mxu0 0.0
    %272 = vmatpush1.msra.mxu0 %v248
    %273 = vmatprep.subr.mxu0 0.0
    %274 = vmatpush1.msra.mxu0 %v249
    %275 = vmatprep.subr.mxu0 0.0
    %276 = vmatpush1.msra.mxu0 %v250
    %277 = vmatprep.subr.mxu0 0.0
    %278 = vmatpush1.msra.mxu0 %v251
    %279 = vmatprep.subr.mxu0 0.0
    %280 = vmatpush1.msra.mxu0 %v252
    %281 = vmatprep.subr.mxu0 0.0
    %282 = vmatpush1.msra.mxu0 %v253
    %283 = vmatprep.subr.mxu0 0.0
    %284 = vmatpush1.msra.mxu0 %v254
    %285 = vmatprep.subr.mxu0 0.0
    %286 = vmatpush1.msra.mxu0 %v255
    %287 = vmatprep.subr.mxu0 0.0
    %288 = vmatpush1.msra.mxu0 %v256
    %289 = vmatprep.subr.mxu0 0.0
    %290 = vmatpush1.msra.mxu0 %v257
    %291 = vmatprep.subr.mxu0 0.0
    %292 = vmatpush1.msra.mxu0 %v258
    %293 = vmatprep.subr.mxu0 0.0
    %294 = vmatpush1.msra.mxu0 %v259
    %295 = vmatprep.subr.mxu0 0.0
    %296 = vmatpush1.msra.mxu0 %v260
    %297 = vmatprep.subr.mxu0 0.0
    %298 = vmatpush1.msra.mxu0 0.0
    %299 = vmatprep.subr.mxu0 0.0
    %300 = vmatpush1.msra.mxu0 0.0
    %301 = vmatprep.subr.mxu0 0.0
    %302 = vmatpush1.msra.mxu0 0.0
    %303 = vmatprep.subr.mxu0 0.0
    %304 = vmatpush1.msra.mxu0 0.0
    %305 = vmatprep.subr.mxu0 0.0
    %306 = vmatpush1.msra.mxu0 0.0
    %307 = vmatprep.subr.mxu0 0.0
    %308 = vmatpush1.msra.mxu0 0.0
    %309 = vmatprep.subr.mxu0 0.0
    %310 = vmatpush1.msra.mxu0 0.0
    %311 = vmatprep.subr.mxu0 0.0
    %312 = vmatpush1.msra.mxu0 0.0
    %313 = vmatprep.subr.mxu0 0.0
    %314 = vmatpush1.msra.mxu0 0.0
    %315 = vmatprep.subr.mxu0 0.0
    %316 = vmatpush1.msra.mxu0 0.0
    %317 = vmatprep.subr.mxu0 0.0
    %318 = vmatpush1.msra.mxu0 0.0
    %319 = vmatprep.subr.mxu0 0.0
    %320 = vmatpush1.msra.mxu0 0.0
    %321 = vmatprep.subr.mxu0 0.0
    %322 = vmatpush1.msra.mxu0 0.0
    %323 = vmatprep.subr.mxu0 0.0
    %324 = vmatpush1.msra.mxu0 0.0
    %325 = vmatprep.subr.mxu0 0.0
    %326 = vmatpush1.msra.mxu0 0.0
    %327 = vmatprep.subr.mxu0 0.0
    %328 = vmatpush1.msra.mxu0 0.0
    %329 = vmatprep.mubr.f32.mxu0 0.0
    %330 = vmatmul.mubr.f32.gmra.mrb[0].mxu0 %v243
    %v331 = vpop.f32.mrb[0].mxu0
    %v332 = vadd.f32 %v264, %v331
    %v333 = vpop.f32.mrb[0].mxu0
    %334 = vdwg.mxu0
    %v335 = vmax.f32 %v332, 0.0
    %s336 = scalar_lea.vmem [#allocation6], 384
    %v337 = vld [vmem:[%s336] sm:$0xff]
    %v338 = vld [vmem:[%s336 + $0x8] sm:$0xff]
    %v339 = vld [vmem:[%s336 + $0x10] sm:$0xff]
    %v340 = vld [vmem:[%s336 + $0x18] sm:$0xff]
    %v341 = vld [vmem:[%s336 + $0x20] sm:$0xff]
    %v342 = vld [vmem:[%s336 + $0x28] sm:$0xff]
    %v343 = vld [vmem:[%s336 + $0x30] sm:$0xff]
    %v344 = vld [vmem:[%s336 + $0x38] sm:$0xff]
    %v345 = vld [vmem:[%s336 + $0x40] sm:$0xff]
    %v346 = vld [vmem:[%s336 + $0x48] sm:$0xff]
    %v347 = vld [vmem:[%s336 + $0x50] sm:$0xff]
    %v348 = vld [vmem:[%s336 + $0x58] sm:$0xff]
    %v349 = vld [vmem:[%s336 + $0x60] sm:$0xff]
    %v350 = vld [vmem:[%s336 + $0x68] sm:$0xff]
    %v351 = vld [vmem:[%s336 + $0x70] sm:$0xff]
    %v352 = vld [vmem:[%s336 + $0x78] sm:$0xff]
    %v353 = vlaneseq
    %v354 = vshrl.u32 %v353, 7
    %v355 = vsub.s32 0, %v354
    %v356 = vrot.slane %v60, %v355
    %357 = vmatprep.subr.mxu0 0.0
    %358 = vmatpush1.msra.mxu0 %v337
    %359 = vmatprep.subr.mxu0 0.0
    %360 = vmatpush1.msra.mxu0 %v338
    %361 = vmatprep.subr.mxu0 0.0
    %362 = vmatpush1.msra.mxu0 %v339
    %363 = vmatprep.subr.mxu0 0.0
    %364 = vmatpush1.msra.mxu0 %v340
    %365 = vmatprep.subr.mxu0 0.0
    %366 = vmatpush1.msra.mxu0 %v341
    %367 = vmatprep.subr.mxu0 0.0
    %368 = vmatpush1.msra.mxu0 %v342
    %369 = vmatprep.subr.mxu0 0.0
    %370 = vmatpush1.msra.mxu0 %v343
    %371 = vmatprep.subr.mxu0 0.0
    %372 = vmatpush1.msra.mxu0 %v344
    %373 = vmatprep.subr.mxu0 0.0
    %374 = vmatpush1.msra.mxu0 %v345
    %375 = vmatprep.subr.mxu0 0.0
    %376 = vmatpush1.msra.mxu0 %v346
    %377 = vmatprep.subr.mxu0 0.0
    %378 = vmatpush1.msra.mxu0 %v347
    %379 = vmatprep.subr.mxu0 0.0
    %380 = vmatpush1.msra.mxu0 %v348
    %381 = vmatprep.subr.mxu0 0.0
    %382 = vmatpush1.msra.mxu0 %v349
    %383 = vmatprep.subr.mxu0 0.0
    %384 = vmatpush1.msra.mxu0 %v350
    %385 = vmatprep.subr.mxu0 0.0
    %386 = vmatpush1.msra.mxu0 %v351
    %387 = vmatprep.subr.mxu0 0.0
    %388 = vmatpush1.msra.mxu0 %v352
    %389 = vmatprep.subr.mxu0 0.0
    %390 = vmatpush1.msra.mxu0 0.0
    %391 = vmatprep.subr.mxu0 0.0
    %392 = vmatpush1.msra.mxu0 0.0
    %393 = vmatprep.subr.mxu0 0.0
    %394 = vmatpush1.msra.mxu0 0.0
    %395 = vmatprep.subr.mxu0 0.0
    %396 = vmatpush1.msra.mxu0 0.0
    %397 = vmatprep.subr.mxu0 0.0
    %398 = vmatpush1.msra.mxu0 0.0
    %399 = vmatprep.subr.mxu0 0.0
    %400 = vmatpush1.msra.mxu0 0.0
    %401 = vmatprep.subr.mxu0 0.0
    %402 = vmatpush1.msra.mxu0 0.0
    %403 = vmatprep.subr.mxu0 0.0
    %404 = vmatpush1.msra.mxu0 0.0
    %405 = vmatprep.subr.mxu0 0.0
    %406 = vmatpush1.msra.mxu0 0.0
    %407 = vmatprep.subr.mxu0 0.0
    %408 = vmatpush1.msra.mxu0 0.0
    %409 = vmatprep.subr.mxu0 0.0
    %410 = vmatpush1.msra.mxu0 0.0
    %411 = vmatprep.subr.mxu0 0.0
    %412 = vmatpush1.msra.mxu0 0.0
    %413 = vmatprep.subr.mxu0 0.0
    %414 = vmatpush1.msra.mxu0 0.0
    %415 = vmatprep.subr.mxu0 0.0
    %416 = vmatpush1.msra.mxu0 0.0
    %417 = vmatprep.subr.mxu0 0.0
    %418 = vmatpush1.msra.mxu0 0.0
    %419 = vmatprep.subr.mxu0 0.0
    %420 = vmatpush1.msra.mxu0 0.0
    %421 = vmatprep.mubr.f32.mxu0 0.0
    %422 = vmatmul.mubr.f32.gmra.mrb[0].mxu0 %v335
    %v423 = vpop.f32.mrb[0].mxu0
    %v424 = vadd.f32 %v356, %v423
    %v425 = vpop.f32.mrb[0].mxu0
    %426 = vdwg.mxu0
    %427 = vst.msk [vmem:[#allocation9] sm:$0xff] %vm54, %v424
    // Predicated region
    $region26: #{tpu_custom_call.1} parent=1 // pred_check
      _
    $region27: #{tpu_custom_call.1} parent=1 // pred_check_branch
      %429 = sbr.rel (0) target = $region29
    $region28: #{tpu_custom_call.1} parent=1 // pred_region
      %s431 = ssub.s32 128, 128
      %432 = vsyncadd [#allocation5], %s431
      %s434 = sshll.u32 [#allocation9], 4
      %s435 = int_to_ptr.vmem [resolvable:$true] %s434
      %437 = dma.vmem_to_hbm [thread:$0]  %s435, 128, %s3, [#allocation5]
    $region29: #{tpu_custom_call.1} parent=1 // pred_fallthru
      _
    // Predicated region
    $region30: #{tpu_custom_call.1} parent=1 // pred_check
      _
    $region31: #{tpu_custom_call.1} parent=1 // pred_check_branch
      %439 = sbr.rel (0) target = $region33
    $region32: #{tpu_custom_call.1} parent=1 // pred_region
      %440 = dma.done [#allocation5], 128
    $region33: #{tpu_custom_call.1} parent=1 // pred_fallthru
      _
    %441 = vsyncpa [#allocation4], 1
    %442 = vsyncpa [#allocation7], 1
    %443 = vsyncpa [#allocation5], 1

</llo_original>
